<compile_context>
chip_gen: v7x
topology: tpu7x:2x2x1
jax: 0.10.0
libtpu: 0.0.40
codegen_flags: <defaults>
</compile_context>

<pallas_src>
import jax
import jax.numpy as jnp
from jax import lax
from jax.experimental import pallas as pl
from jax.experimental.pallas import tpu as pltpu


def _round_up(x, m):
    return ((x + m - 1) // m) * m


# ----------------------------- Pallas kernel --------------------------------
def conv_fma_kernel(p_ref, w_ref, b_ref, o_ref):
    """Direct conv as K unrolled VPU FMAs (no MXU).

    p_ref: (BN, K, TM)   im2col patch rows, lane-dense in flattened spatial
    w_ref: (OC, K)       weights
    b_ref: (OC, 1)       bias
    o_ref: (BN, OC, TM)  output tile, already in contiguous (N, OC, OH*OW) layout
    """
    p = p_ref[...]
    w = w_ref[...]
    K = p.shape[1]
    # acc[n, oc, m] = sum_k w[oc, k] * p[n, k, m]
    acc = w[None, :, 0:1] * p[:, 0:1, :]
    for k in range(1, K):
        acc = acc + w[None, :, k:k + 1] * p[:, k:k + 1, :]
    o_ref[...] = (acc + b_ref[...][None]).astype(o_ref.dtype)


def conv_gemm(patches, w_mat, b_col, *, bn, tm):
    """patches: (N, K, Mp) -> output (N, OC, Mp)."""
    N, K, Mp = patches.shape
    OC = w_mat.shape[0]
    grid = (N // bn, Mp // tm)
    return pl.pallas_call(
        conv_fma_kernel,
        out_shape=jax.ShapeDtypeStruct((N, OC, Mp), patches.dtype),
        grid_spec=pltpu.PrefetchScalarGridSpec(
            num_scalar_prefetch=0,
            grid=grid,
            in_specs=[
                pl.BlockSpec((bn, K, tm), lambda n, s: (n, 0, s)),   # patch tile
                pl.BlockSpec((OC, K), lambda n, s: (0, 0)),          # whole weights
                pl.BlockSpec((OC, 1), lambda n, s: (0, 0)),          # whole bias
            ],
            out_specs=pl.BlockSpec((bn, OC, tm), lambda n, s: (n, 0, s)),
        ),
        compiler_params=pltpu.CompilerParams(
            dimension_semantics=("parallel", "parallel"),
            # Permit XLA to fuse the im2col pad/reshape/transpose into the
            # patch-input side of the pallas call (avoids a 2nd HBM copy of
            # the input).  Weights/bias are tiny; leave them alone.
            allow_input_fusion=[True, False, False],
        ),
    )(patches, w_mat, b_col)


# ------------------------------- wrapper -------------------------------------
_BIG_TILE = 8192    # lanes; ~1 MiB double-buffered f32 -> fits v5e/v6e/v7x VMEM
_SMALL_COLS = 4096  # below this, one grid step beats any pipelining


def conv2d_pallas(x_nchw, weight, bias, *, stride=2, padding=2):
    """Conv2d forward matching torch.nn.Conv2d(3, 3, 2, stride=2, padding=2)."""
    N, C, H, W = x_nchw.shape
    OC, _, KH, KW = weight.shape
    assert KH == stride and KW == stride, "non-overlapping patch path needs k == stride"
    OH = (H + 2 * padding - KH) // stride + 1
    OW = (W + 2 * padding - KW) // stride + 1
    OHW = OH * OW
    K = C * KH * KW

    # Pad H, W; crop to the region the conv actually reads (stride*OH x stride*OW).
    xpad = jnp.pad(x_nchw, ((0, 0), (0, 0), (padding, padding), (padding, padding)))
    xc = xpad[:, :, :stride * OH, :stride * OW]

    # stride == kernel  =>  patches tile the input with zero duplication:
    # one reshape+transpose gives (N, K, OH*OW), K ordered (c, kh, kw) to match
    # weight.reshape(OC, K).  Kernel writes (N, OC, OH*OW), so NCHW is free.
    x6 = xc.reshape(N, C, OH, KH, OW, KW)
    patches = x6.transpose(0, 1, 3, 5, 2, 4).reshape(N, K, OHW)

    M128 = _round_up(OHW, 128)
    if N * M128 <= _SMALL_COLS:
        # Whole problem in a single grid step; full-dim blocks, no padding,
        # no post-kernel slice.
        bn, tm, m_pad = N, OHW, OHW
    else:
        # Large inputs: big lane-dense tiles, one image per step.
        bn = 1
        tm = min(_BIG_TILE, M128)
        m_pad = _round_up(OHW, tm)
        if (m_pad - OHW) * 100 > 15 * m_pad:
            # Cap zero-padding waste: largest 128-multiple tile dividing M128.
            tm = max(d for d in range(128, min(_BIG_TILE, M128) + 1, 128)
                     if M128 % d == 0)
            m_pad = M128
        # TODO(synk): on v7x, round (N * m_pad // tm) grid steps to a multiple
        #             of 2 so both TensorCores get equal tile counts.

    if m_pad != OHW:
        patches = jnp.pad(patches, ((0, 0), (0, 0), (0, m_pad - OHW)))

    w_mat = weight.reshape(OC, K)     # (OC, K)
    b_col = bias.reshape(OC, 1)       # (OC, 1)

    out = conv_gemm(patches, w_mat, b_col, bn=bn, tm=tm)   # (N, OC, m_pad)
    if m_pad != OHW:
        out = out[:, :, :OHW]
    return out.reshape(N, OC, OH, OW)                      # NCHW, free reshape


# --------------------------------- main ---------------------------------------
if __name__ == "__main__":
    key = jax.random.PRNGKey(0)
    kx, kw, kb = jax.random.split(key, 3)

    # Module implies in_channels=3; batch 4 (as in the original script), spatial 16.
    N, C, H, W = 4, 3, 16, 16
    OC, KH, KW = 3, 2, 2

    x1 = jax.random.normal(kx, (N, C, H, W), dtype=jnp.float32)

    # Deterministic Conv2d parameter init (uniform +/- 1/sqrt(fan_in), like torch).
    fan_in = C * KH * KW
    bound = 1.0 / (fan_in ** 0.5)
    weight = jax.random.uniform(
        kw, (OC, C, KH, KW), minval=-bound, maxval=bound, dtype=jnp.float32
    )
    bias = jax.random.uniform(
        kb, (OC,), minval=-bound, maxval=bound, dtype=jnp.float32
    )

    out = conv2d_pallas(x1, weight, bias, stride=2, padding=2)
    out = jax.block_until_ready(out)

    # Reference check against XLA's conv.
    ref = lax.conv_general_dilated(
        x1, weight,
        window_strides=(2, 2),
        padding=((2, 2), (2, 2)),
        dimension_numbers=("NCHW", "OIHW", "NCHW"),
    ) + bias.reshape(1, OC, 1, 1)

    assert out.shape == (N, OC, 10, 10), out.shape
    assert jnp.allclose(out, ref, atol=1e-5, rtol=1e-5)

    print("KERNEL_OK")
</pallas_src>

<mosaic_0001>
module attributes {stable_mosaic.version = 11 : i64} {
  func.func @conv_fma_kernel(%arg0: i32, %arg1: i32, %arg2: memref<4x12x100xf32, #tpu.memory_space<vmem>>, %arg3: memref<3x12xf32, #tpu.memory_space<vmem>>, %arg4: memref<3x1xf32, #tpu.memory_space<vmem>>, %arg5: memref<4x3x100xf32, #tpu.memory_space<vmem>>) attributes {dimension_semantics = [#tpu.dimension_semantics<parallel>, #tpu.dimension_semantics<parallel>], iteration_bounds = array<i64: 1, 1>, scalar_prefetch = 0 : i64, scratch_operands = 0 : i64, tpu.core_type = #tpu.core_type<tc>, window_params = [{transform_indices = @transform_0, window_bounds = array<i64: 4, 12, 100>}, {pipeline_mode = #tpu.pipeline_mode<synchronous>, transform_indices = @transform_1, window_bounds = array<i64: 3, 12>}, {pipeline_mode = #tpu.pipeline_mode<synchronous>, transform_indices = @transform_2, window_bounds = array<i64: 3, 1>}, {transform_indices = @transform_3, window_bounds = array<i64: 4, 3, 100>}]} {
    %c0 = arith.constant 0 : index
    %c0_0 = arith.constant 0 : index
    %c0_1 = arith.constant 0 : index
    %0 = vector.load %arg2[%c0, %c0_0, %c0_1] : memref<4x12x100xf32, #tpu.memory_space<vmem>>, vector<4x12x100xf32>
    %c0_2 = arith.constant 0 : index
    %c0_3 = arith.constant 0 : index
    %1 = vector.load %arg3[%c0_2, %c0_3] : memref<3x12xf32, #tpu.memory_space<vmem>>, vector<3x12xf32>
    %2 = vector.extract_strided_slice %1 {offsets = [0, 0], sizes = [3, 1], strides = [1, 1]} : vector<3x12xf32> to vector<3x1xf32>
    %3 = vector.shape_cast %2 : vector<3x1xf32> to vector<1x3x1xf32>
    %4 = vector.extract_strided_slice %0 {offsets = [0, 0, 0], sizes = [4, 1, 100], strides = [1, 1, 1]} : vector<4x12x100xf32> to vector<4x1x100xf32>
    %5 = vector.broadcast %3 : vector<1x3x1xf32> to vector<4x3x100xf32>
    %6 = vector.broadcast %4 : vector<4x1x100xf32> to vector<4x3x100xf32>
    %7 = arith.mulf %5, %6 : vector<4x3x100xf32>
    %8 = vector.extract_strided_slice %1 {offsets = [0, 1], sizes = [3, 1], strides = [1, 1]} : vector<3x12xf32> to vector<3x1xf32>
    %9 = vector.shape_cast %8 : vector<3x1xf32> to vector<1x3x1xf32>
    %10 = vector.extract_strided_slice %0 {offsets = [0, 1, 0], sizes = [4, 1, 100], strides = [1, 1, 1]} : vector<4x12x100xf32> to vector<4x1x100xf32>
    %11 = vector.broadcast %9 : vector<1x3x1xf32> to vector<4x3x100xf32>
    %12 = vector.broadcast %10 : vector<4x1x100xf32> to vector<4x3x100xf32>
    %13 = arith.mulf %11, %12 : vector<4x3x100xf32>
    %14 = arith.addf %7, %13 : vector<4x3x100xf32>
    %15 = vector.extract_strided_slice %1 {offsets = [0, 2], sizes = [3, 1], strides = [1, 1]} : vector<3x12xf32> to vector<3x1xf32>
    %16 = vector.shape_cast %15 : vector<3x1xf32> to vector<1x3x1xf32>
    %17 = vector.extract_strided_slice %0 {offsets = [0, 2, 0], sizes = [4, 1, 100], strides = [1, 1, 1]} : vector<4x12x100xf32> to vector<4x1x100xf32>
    %18 = vector.broadcast %16 : vector<1x3x1xf32> to vector<4x3x100xf32>
    %19 = vector.broadcast %17 : vector<4x1x100xf32> to vector<4x3x100xf32>
    %20 = arith.mulf %18, %19 : vector<4x3x100xf32>
    %21 = arith.addf %14, %20 : vector<4x3x100xf32>
    %22 = vector.extract_strided_slice %1 {offsets = [0, 3], sizes = [3, 1], strides = [1, 1]} : vector<3x12xf32> to vector<3x1xf32>
    %23 = vector.shape_cast %22 : vector<3x1xf32> to vector<1x3x1xf32>
    %24 = vector.extract_strided_slice %0 {offsets = [0, 3, 0], sizes = [4, 1, 100], strides = [1, 1, 1]} : vector<4x12x100xf32> to vector<4x1x100xf32>
    %25 = vector.broadcast %23 : vector<1x3x1xf32> to vector<4x3x100xf32>
    %26 = vector.broadcast %24 : vector<4x1x100xf32> to vector<4x3x100xf32>
    %27 = arith.mulf %25, %26 : vector<4x3x100xf32>
    %28 = arith.addf %21, %27 : vector<4x3x100xf32>
    %29 = vector.extract_strided_slice %1 {offsets = [0, 4], sizes = [3, 1], strides = [1, 1]} : vector<3x12xf32> to vector<3x1xf32>
    %30 = vector.shape_cast %29 : vector<3x1xf32> to vector<1x3x1xf32>
    %31 = vector.extract_strided_slice %0 {offsets = [0, 4, 0], sizes = [4, 1, 100], strides = [1, 1, 1]} : vector<4x12x100xf32> to vector<4x1x100xf32>
    %32 = vector.broadcast %30 : vector<1x3x1xf32> to vector<4x3x100xf32>
    %33 = vector.broadcast %31 : vector<4x1x100xf32> to vector<4x3x100xf32>
    %34 = arith.mulf %32, %33 : vector<4x3x100xf32>
    %35 = arith.addf %28, %34 : vector<4x3x100xf32>
    %36 = vector.extract_strided_slice %1 {offsets = [0, 5], sizes = [3, 1], strides = [1, 1]} : vector<3x12xf32> to vector<3x1xf32>
    %37 = vector.shape_cast %36 : vector<3x1xf32> to vector<1x3x1xf32>
    %38 = vector.extract_strided_slice %0 {offsets = [0, 5, 0], sizes = [4, 1, 100], strides = [1, 1, 1]} : vector<4x12x100xf32> to vector<4x1x100xf32>
    %39 = vector.broadcast %37 : vector<1x3x1xf32> to vector<4x3x100xf32>
    %40 = vector.broadcast %38 : vector<4x1x100xf32> to vector<4x3x100xf32>
    %41 = arith.mulf %39, %40 : vector<4x3x100xf32>
    %42 = arith.addf %35, %41 : vector<4x3x100xf32>
    %43 = vector.extract_strided_slice %1 {offsets = [0, 6], sizes = [3, 1], strides = [1, 1]} : vector<3x12xf32> to vector<3x1xf32>
    %44 = vector.shape_cast %43 : vector<3x1xf32> to vector<1x3x1xf32>
    %45 = vector.extract_strided_slice %0 {offsets = [0, 6, 0], sizes = [4, 1, 100], strides = [1, 1, 1]} : vector<4x12x100xf32> to vector<4x1x100xf32>
    %46 = vector.broadcast %44 : vector<1x3x1xf32> to vector<4x3x100xf32>
    %47 = vector.broadcast %45 : vector<4x1x100xf32> to vector<4x3x100xf32>
    %48 = arith.mulf %46, %47 : vector<4x3x100xf32>
    %49 = arith.addf %42, %48 : vector<4x3x100xf32>
    %50 = vector.extract_strided_slice %1 {offsets = [0, 7], sizes = [3, 1], strides = [1, 1]} : vector<3x12xf32> to vector<3x1xf32>
    %51 = vector.shape_cast %50 : vector<3x1xf32> to vector<1x3x1xf32>
    %52 = vector.extract_strided_slice %0 {offsets = [0, 7, 0], sizes = [4, 1, 100], strides = [1, 1, 1]} : vector<4x12x100xf32> to vector<4x1x100xf32>
    %53 = vector.broadcast %51 : vector<1x3x1xf32> to vector<4x3x100xf32>
    %54 = vector.broadcast %52 : vector<4x1x100xf32> to vector<4x3x100xf32>
    %55 = arith.mulf %53, %54 : vector<4x3x100xf32>
    %56 = arith.addf %49, %55 : vector<4x3x100xf32>
    %57 = vector.extract_strided_slice %1 {offsets = [0, 8], sizes = [3, 1], strides = [1, 1]} : vector<3x12xf32> to vector<3x1xf32>
    %58 = vector.shape_cast %57 : vector<3x1xf32> to vector<1x3x1xf32>
    %59 = vector.extract_strided_slice %0 {offsets = [0, 8, 0], sizes = [4, 1, 100], strides = [1, 1, 1]} : vector<4x12x100xf32> to vector<4x1x100xf32>
    %60 = vector.broadcast %58 : vector<1x3x1xf32> to vector<4x3x100xf32>
    %61 = vector.broadcast %59 : vector<4x1x100xf32> to vector<4x3x100xf32>
    %62 = arith.mulf %60, %61 : vector<4x3x100xf32>
    %63 = arith.addf %56, %62 : vector<4x3x100xf32>
    %64 = vector.extract_strided_slice %1 {offsets = [0, 9], sizes = [3, 1], strides = [1, 1]} : vector<3x12xf32> to vector<3x1xf32>
    %65 = vector.shape_cast %64 : vector<3x1xf32> to vector<1x3x1xf32>
    %66 = vector.extract_strided_slice %0 {offsets = [0, 9, 0], sizes = [4, 1, 100], strides = [1, 1, 1]} : vector<4x12x100xf32> to vector<4x1x100xf32>
    %67 = vector.broadcast %65 : vector<1x3x1xf32> to vector<4x3x100xf32>
    %68 = vector.broadcast %66 : vector<4x1x100xf32> to vector<4x3x100xf32>
    %69 = arith.mulf %67, %68 : vector<4x3x100xf32>
    %70 = arith.addf %63, %69 : vector<4x3x100xf32>
    %71 = vector.extract_strided_slice %1 {offsets = [0, 10], sizes = [3, 1], strides = [1, 1]} : vector<3x12xf32> to vector<3x1xf32>
    %72 = vector.shape_cast %71 : vector<3x1xf32> to vector<1x3x1xf32>
    %73 = vector.extract_strided_slice %0 {offsets = [0, 10, 0], sizes = [4, 1, 100], strides = [1, 1, 1]} : vector<4x12x100xf32> to vector<4x1x100xf32>
    %74 = vector.broadcast %72 : vector<1x3x1xf32> to vector<4x3x100xf32>
    %75 = vector.broadcast %73 : vector<4x1x100xf32> to vector<4x3x100xf32>
    %76 = arith.mulf %74, %75 : vector<4x3x100xf32>
    %77 = arith.addf %70, %76 : vector<4x3x100xf32>
    %78 = vector.extract_strided_slice %1 {offsets = [0, 11], sizes = [3, 1], strides = [1, 1]} : vector<3x12xf32> to vector<3x1xf32>
    %79 = vector.shape_cast %78 : vector<3x1xf32> to vector<1x3x1xf32>
    %80 = vector.extract_strided_slice %0 {offsets = [0, 11, 0], sizes = [4, 1, 100], strides = [1, 1, 1]} : vector<4x12x100xf32> to vector<4x1x100xf32>
    %81 = vector.broadcast %79 : vector<1x3x1xf32> to vector<4x3x100xf32>
    %82 = vector.broadcast %80 : vector<4x1x100xf32> to vector<4x3x100xf32>
    %83 = arith.mulf %81, %82 : vector<4x3x100xf32>
    %84 = arith.addf %77, %83 : vector<4x3x100xf32>
    %c0_4 = arith.constant 0 : index
    %c0_5 = arith.constant 0 : index
    %85 = vector.load %arg4[%c0_4, %c0_5] : memref<3x1xf32, #tpu.memory_space<vmem>>, vector<3x1xf32>
    %86 = vector.shape_cast %85 : vector<3x1xf32> to vector<1x3x1xf32>
    %87 = vector.broadcast %86 : vector<1x3x1xf32> to vector<4x3x100xf32>
    %88 = arith.addf %84, %87 : vector<4x3x100xf32>
    %c0_6 = arith.constant 0 : index
    %c0_7 = arith.constant 0 : index
    %c0_8 = arith.constant 0 : index
    %89 = vector.load %arg5[%c0_6, %c0_7, %c0_8] : memref<4x3x100xf32, #tpu.memory_space<vmem>>, vector<4x3x100xf32>
    tpu.vector_store %arg5[%c0_6, %c0_7, %c0_8], %88 {strides = array<i32>} : memref<4x3x100xf32, #tpu.memory_space<vmem>>, vector<4x3x100xf32>,
    return
  }
  func.func @transform_0(%arg0: i32, %arg1: i32) -> (i32, i32, i32) {
    %c0_i32 = arith.constant 0 : i32
    %c0_i32_0 = arith.constant 0 : i32
    return %arg0, %c0_i32, %arg1 : i32, i32, i32
  }
  func.func @transform_1(%arg0: i32, %arg1: i32) -> (i32, i32) {
    %c0_i32 = arith.constant 0 : i32
    %c0_i32_0 = arith.constant 0 : i32
    %c0_i32_1 = arith.constant 0 : i32
    return %c0_i32, %c0_i32_0 : i32, i32
  }
  func.func @transform_2(%arg0: i32, %arg1: i32) -> (i32, i32) {
    %c0_i32 = arith.constant 0 : i32
    %c0_i32_0 = arith.constant 0 : i32
    %c0_i32_1 = arith.constant 0 : i32
    return %c0_i32, %c0_i32_0 : i32, i32
  }
  func.func @transform_3(%arg0: i32, %arg1: i32) -> (i32, i32, i32) {
    %c0_i32 = arith.constant 0 : i32
    %c0_i32_0 = arith.constant 0 : i32
    return %arg0, %c0_i32, %arg1 : i32, i32, i32
  }
}

</mosaic_0001>

<llo_original>
// kernel: tpu_custom_call.1
$region0: #{tpu_custom_call.1}
  #allocation0 [shape = 'u32[]', space=smem, size = 0x4, offset = 0x4, fixed_abs, tag = 'smem constant byte address 0x4 - core index']
  #allocation1 [shape = 'u32[144,128]{1,0:T(1,128)}', space=vmem, size = 0x12000, scoped, tag = 'internal scratch']
  %s0 = inlined_call_operand.vmem [shape: f32[4,12,100], index: 0, kind: input, shape index: {}]
  %s1 = inlined_call_operand.vmem [shape: f32[3,12], index: 1, kind: input, shape index: {}]
  %s2 = inlined_call_operand.vmem [shape: f32[3,1], index: 2, kind: input, shape index: {}]
  %s3 = inlined_call_operand.vmem [shape: f32[4,3,100], index: 3, kind: output, shape index: {}]
  %s4 = sld [smem:[#allocation0]]
  $region22: #{tpu_custom_call.1} parent=0
    _
  %s6 = ssub.s32 1, %s4
  %s7 = scalar_select 0, %s6, %s4
  // Predicated region
  $region2: #{tpu_custom_call.1} parent=0 // pred_check
    _
  $region3: #{tpu_custom_call.1} parent=0 // pred_check_branch
    %9 = sbr.rel (0) target = $region5
  $region4: #{tpu_custom_call.1} parent=0 // pred_region
    _
  $region5: #{tpu_custom_call.1} parent=0 // pred_fallthru
    _
  // Predicated region
  $region6: #{tpu_custom_call.1} parent=0 // pred_check
    _
  $region7: #{tpu_custom_call.1} parent=0 // pred_check_branch
    %11 = sbr.rel (0) target = $region9
  $region8: #{tpu_custom_call.1} parent=0 // pred_region
    _
  $region9: #{tpu_custom_call.1} parent=0 // pred_fallthru
    _
  // Predicated region
  $region10: #{tpu_custom_call.1} parent=0 // pred_check
    _
  $region11: #{tpu_custom_call.1} parent=0 // pred_check_branch
    %13 = sbr.rel (0) target = $region13
  $region12: #{tpu_custom_call.1} parent=0 // pred_region
    _
  $region13: #{tpu_custom_call.1} parent=0 // pred_fallthru
    _
  %v14 = vld [vmem:[%s0] sm:$0xff]
  %v15 = vld [vmem:[%s0 + $0x8] sm:$0xf]
  %v16 = vld [vmem:[%s0 + $0x10] sm:$0xff]
  %v17 = vld [vmem:[%s0 + $0x18] sm:$0xf]
  %v18 = vld [vmem:[%s0 + $0x20] sm:$0xff]
  %v19 = vld [vmem:[%s0 + $0x28] sm:$0xf]
  %v20 = vld [vmem:[%s0 + $0x30] sm:$0xff]
  %v21 = vld [vmem:[%s0 + $0x38] sm:$0xf]
  %v22 = vld [vmem:[%s1] sm:$0x7]
  %24 = vset.pattern.permute.xlu0 0
  %25 = vperm.xlu0 %24, %v22
  %v26 = vpop.permute.xlu0 %25
  %v28 = vlaneseq
  %v29 = vshrl.u32 %v28, 7
  %v30 = vsub.s32 0, %v29
  %v31 = vrot.slane %v14, %v30
  %v32 = vlaneseq
  %v33 = vshrl.u32 %v32, 7
  %v34 = vsub.s32 0, %v33
  %v35 = vrot.slane %v16, %v34
  %v36 = vlaneseq
  %v37 = vshrl.u32 %v36, 7
  %v38 = vsub.s32 0, %v37
  %v39 = vrot.slane %v18, %v38
  %v40 = vlaneseq
  %v41 = vshrl.u32 %v40, 7
  %v42 = vsub.s32 0, %v41
  %v43 = vrot.slane %v20, %v42
  %v44 = vmul.f32 %v26, %v31
  %v45 = vmul.f32 %v26, %v35
  %v46 = vmul.f32 %v26, %v39
  %v47 = vmul.f32 %v26, %v43
  %48 = vset.pattern.permute.xlu0 1
  %49 = vperm.xlu0 %48, %v22
  %v50 = vpop.permute.xlu0 %49
  %v52 = vlaneseq
  %v53 = vshrl.u32 %v52, 7
  %v54 = vsub.s32 1, %v53
  %v55 = vrot.slane %v14, %v54
  %v56 = vlaneseq
  %v57 = vshrl.u32 %v56, 7
  %v58 = vsub.s32 1, %v57
  %v59 = vrot.slane %v16, %v58
  %v60 = vlaneseq
  %v61 = vshrl.u32 %v60, 7
  %v62 = vsub.s32 1, %v61
  %v63 = vrot.slane %v18, %v62
  %v64 = vlaneseq
  %v65 = vshrl.u32 %v64, 7
  %v66 = vsub.s32 1, %v65
  %v67 = vrot.slane %v20, %v66
  %v68 = vmul.f32 %v50, %v55
  %v69 = vmul.f32 %v50, %v59
  %v70 = vmul.f32 %v50, %v63
  %v71 = vmul.f32 %v50, %v67
  %v72 = vadd.f32 %v44, %v68
  %v73 = vadd.f32 %v45, %v69
  %v74 = vadd.f32 %v46, %v70
  %v75 = vadd.f32 %v47, %v71
  %76 = vset.pattern.permute.xlu0 2
  %77 = vperm.xlu0 %76, %v22
  %v78 = vpop.permute.xlu0 %77
  %v80 = vlaneseq
  %v81 = vshrl.u32 %v80, 7
  %v82 = vsub.s32 2, %v81
  %v83 = vrot.slane %v14, %v82
  %v84 = vlaneseq
  %v85 = vshrl.u32 %v84, 7
  %v86 = vsub.s32 2, %v85
  %v87 = vrot.slane %v16, %v86
  %v88 = vlaneseq
  %v89 = vshrl.u32 %v88, 7
  %v90 = vsub.s32 2, %v89
  %v91 = vrot.slane %v18, %v90
  %v92 = vlaneseq
  %v93 = vshrl.u32 %v92, 7
  %v94 = vsub.s32 2, %v93
  %v95 = vrot.slane %v20, %v94
  %v96 = vmul.f32 %v78, %v83
  %v97 = vmul.f32 %v78, %v87
  %v98 = vmul.f32 %v78, %v91
  %v99 = vmul.f32 %v78, %v95
  %v100 = vadd.f32 %v72, %v96
  %v101 = vadd.f32 %v73, %v97
  %v102 = vadd.f32 %v74, %v98
  %v103 = vadd.f32 %v75, %v99
  %104 = vset.pattern.permute.xlu0 3
  %105 = vperm.xlu0 %104, %v22
  %v106 = vpop.permute.xlu0 %105
  %v108 = vlaneseq
  %v109 = vshrl.u32 %v108, 7
  %v110 = vsub.s32 3, %v109
  %v111 = vrot.slane %v14, %v110
  %v112 = vlaneseq
  %v113 = vshrl.u32 %v112, 7
  %v114 = vsub.s32 3, %v113
  %v115 = vrot.slane %v16, %v114
  %v116 = vlaneseq
  %v117 = vshrl.u32 %v116, 7
  %v118 = vsub.s32 3, %v117
  %v119 = vrot.slane %v18, %v118
  %v120 = vlaneseq
  %v121 = vshrl.u32 %v120, 7
  %v122 = vsub.s32 3, %v121
  %v123 = vrot.slane %v20, %v122
  %v124 = vmul.f32 %v106, %v111
  %v125 = vmul.f32 %v106, %v115
  %v126 = vmul.f32 %v106, %v119
  %v127 = vmul.f32 %v106, %v123
  %v128 = vadd.f32 %v100, %v124
  %v129 = vadd.f32 %v101, %v125
  %v130 = vadd.f32 %v102, %v126
  %v131 = vadd.f32 %v103, %v127
  %132 = vset.pattern.permute.xlu0 4
  %133 = vperm.xlu0 %132, %v22
  %v134 = vpop.permute.xlu0 %133
  %v136 = vlaneseq
  %v137 = vshrl.u32 %v136, 7
  %v138 = vsub.s32 4, %v137
  %v139 = vrot.slane %v14, %v138
  %v140 = vlaneseq
  %v141 = vshrl.u32 %v140, 7
  %v142 = vsub.s32 4, %v141
  %v143 = vrot.slane %v16, %v142
  %v144 = vlaneseq
  %v145 = vshrl.u32 %v144, 7
  %v146 = vsub.s32 4, %v145
  %v147 = vrot.slane %v18, %v146
  %v148 = vlaneseq
  %v149 = vshrl.u32 %v148, 7
  %v150 = vsub.s32 4, %v149
  %v151 = vrot.slane %v20, %v150
  %v152 = vmul.f32 %v134, %v139
  %v153 = vmul.f32 %v134, %v143
  %v154 = vmul.f32 %v134, %v147
  %v155 = vmul.f32 %v134, %v151
  %v156 = vadd.f32 %v128, %v152
  %v157 = vadd.f32 %v129, %v153
  %v158 = vadd.f32 %v130, %v154
  %v159 = vadd.f32 %v131, %v155
  %160 = vset.pattern.permute.xlu0 5
  %161 = vperm.xlu0 %160, %v22
  %v162 = vpop.permute.xlu0 %161
  %v164 = vlaneseq
  %v165 = vshrl.u32 %v164, 7
  %v166 = vsub.s32 5, %v165
  %v167 = vrot.slane %v14, %v166
  %v168 = vlaneseq
  %v169 = vshrl.u32 %v168, 7
  %v170 = vsub.s32 5, %v169
  %v171 = vrot.slane %v16, %v170
  %v172 = vlaneseq
  %v173 = vshrl.u32 %v172, 7
  %v174 = vsub.s32 5, %v173
  %v175 = vrot.slane %v18, %v174
  %v176 = vlaneseq
  %v177 = vshrl.u32 %v176, 7
  %v178 = vsub.s32 5, %v177
  %v179 = vrot.slane %v20, %v178
  %v180 = vmul.f32 %v162, %v167
  %v181 = vmul.f32 %v162, %v171
  %v182 = vmul.f32 %v162, %v175
  %v183 = vmul.f32 %v162, %v179
  %v184 = vadd.f32 %v156, %v180
  %v185 = vadd.f32 %v157, %v181
  %v186 = vadd.f32 %v158, %v182
  %v187 = vadd.f32 %v159, %v183
  %188 = vset.pattern.permute.xlu0 6
  %189 = vperm.xlu0 %188, %v22
  %v190 = vpop.permute.xlu0 %189
  %v192 = vlaneseq
  %v193 = vshrl.u32 %v192, 7
  %v194 = vsub.s32 6, %v193
  %v195 = vrot.slane %v14, %v194
  %v196 = vlaneseq
  %v197 = vshrl.u32 %v196, 7
  %v198 = vsub.s32 6, %v197
  %v199 = vrot.slane %v16, %v198
  %v200 = vlaneseq
  %v201 = vshrl.u32 %v200, 7
  %v202 = vsub.s32 6, %v201
  %v203 = vrot.slane %v18, %v202
  %v204 = vlaneseq
  %v205 = vshrl.u32 %v204, 7
  %v206 = vsub.s32 6, %v205
  %v207 = vrot.slane %v20, %v206
  %v208 = vmul.f32 %v190, %v195
  %v209 = vmul.f32 %v190, %v199
  %v210 = vmul.f32 %v190, %v203
  %v211 = vmul.f32 %v190, %v207
  %v212 = vadd.f32 %v184, %v208
  %v213 = vadd.f32 %v185, %v209
  %v214 = vadd.f32 %v186, %v210
  %v215 = vadd.f32 %v187, %v211
  %216 = vset.pattern.permute.xlu0 7
  %217 = vperm.xlu0 %216, %v22
  %v218 = vpop.permute.xlu0 %217
  %v220 = vlaneseq
  %v221 = vshrl.u32 %v220, 7
  %v222 = vsub.s32 7, %v221
  %v223 = vrot.slane %v14, %v222
  %v224 = vlaneseq
  %v225 = vshrl.u32 %v224, 7
  %v226 = vsub.s32 7, %v225
  %v227 = vrot.slane %v16, %v226
  %v228 = vlaneseq
  %v229 = vshrl.u32 %v228, 7
  %v230 = vsub.s32 7, %v229
  %v231 = vrot.slane %v18, %v230
  %v232 = vlaneseq
  %v233 = vshrl.u32 %v232, 7
  %v234 = vsub.s32 7, %v233
  %v235 = vrot.slane %v20, %v234
  %v236 = vmul.f32 %v218, %v223
  %v237 = vmul.f32 %v218, %v227
  %v238 = vmul.f32 %v218, %v231
  %v239 = vmul.f32 %v218, %v235
  %v240 = vadd.f32 %v212, %v236
  %v241 = vadd.f32 %v213, %v237
  %v242 = vadd.f32 %v214, %v238
  %v243 = vadd.f32 %v215, %v239
  %244 = vset.pattern.permute.xlu0 8
  %245 = vperm.xlu0 %244, %v22
  %v246 = vpop.permute.xlu0 %245
  %v248 = vlaneseq
  %v249 = vshrl.u32 %v248, 7
  %v250 = vsub.s32 0, %v249
  %v251 = vrot.slane %v15, %v250
  %v252 = vlaneseq
  %v253 = vshrl.u32 %v252, 7
  %v254 = vsub.s32 0, %v253
  %v255 = vrot.slane %v17, %v254
  %v256 = vlaneseq
  %v257 = vshrl.u32 %v256, 7
  %v258 = vsub.s32 0, %v257
  %v259 = vrot.slane %v19, %v258
  %v260 = vlaneseq
  %v261 = vshrl.u32 %v260, 7
  %v262 = vsub.s32 0, %v261
  %v263 = vrot.slane %v21, %v262
  %v264 = vmul.f32 %v246, %v251
  %v265 = vmul.f32 %v246, %v255
  %v266 = vmul.f32 %v246, %v259
  %v267 = vmul.f32 %v246, %v263
  %v268 = vadd.f32 %v240, %v264
  %v269 = vadd.f32 %v241, %v265
  %v270 = vadd.f32 %v242, %v266
  %v271 = vadd.f32 %v243, %v267
  %272 = vset.pattern.permute.xlu0 9
  %273 = vperm.xlu0 %272, %v22
  %v274 = vpop.permute.xlu0 %273
  %v276 = vlaneseq
  %v277 = vshrl.u32 %v276, 7
  %v278 = vsub.s32 1, %v277
  %v279 = vrot.slane %v15, %v278
  %v280 = vlaneseq
  %v281 = vshrl.u32 %v280, 7
  %v282 = vsub.s32 1, %v281
  %v283 = vrot.slane %v17, %v282
  %v284 = vlaneseq
  %v285 = vshrl.u32 %v284, 7
  %v286 = vsub.s32 1, %v285
  %v287 = vrot.slane %v19, %v286
  %v288 = vlaneseq
  %v289 = vshrl.u32 %v288, 7
  %v290 = vsub.s32 1, %v289
  %v291 = vrot.slane %v21, %v290
  %v292 = vmul.f32 %v274, %v279
  %v293 = vmul.f32 %v274, %v283
  %v294 = vmul.f32 %v274, %v287
  %v295 = vmul.f32 %v274, %v291
  %v296 = vadd.f32 %v268, %v292
  %v297 = vadd.f32 %v269, %v293
  %v298 = vadd.f32 %v270, %v294
  %v299 = vadd.f32 %v271, %v295
  %300 = vset.pattern.permute.xlu0 10
  %301 = vperm.xlu0 %300, %v22
  %v302 = vpop.permute.xlu0 %301
  %v304 = vlaneseq
  %v305 = vshrl.u32 %v304, 7
  %v306 = vsub.s32 2, %v305
  %v307 = vrot.slane %v15, %v306
  %v308 = vlaneseq
  %v309 = vshrl.u32 %v308, 7
  %v310 = vsub.s32 2, %v309
  %v311 = vrot.slane %v17, %v310
  %v312 = vlaneseq
  %v313 = vshrl.u32 %v312, 7
  %v314 = vsub.s32 2, %v313
  %v315 = vrot.slane %v19, %v314
  %v316 = vlaneseq
  %v317 = vshrl.u32 %v316, 7
  %v318 = vsub.s32 2, %v317
  %v319 = vrot.slane %v21, %v318
  %v320 = vmul.f32 %v302, %v307
  %v321 = vmul.f32 %v302, %v311
  %v322 = vmul.f32 %v302, %v315
  %v323 = vmul.f32 %v302, %v319
  %v324 = vadd.f32 %v296, %v320
  %v325 = vadd.f32 %v297, %v321
  %v326 = vadd.f32 %v298, %v322
  %v327 = vadd.f32 %v299, %v323
  %328 = vset.pattern.permute.xlu0 11
  %329 = vperm.xlu0 %328, %v22
  %v330 = vpop.permute.xlu0 %329
  %v332 = vlaneseq
  %v333 = vshrl.u32 %v332, 7
  %v334 = vsub.s32 3, %v333
  %v335 = vrot.slane %v15, %v334
  %v336 = vlaneseq
  %v337 = vshrl.u32 %v336, 7
  %v338 = vsub.s32 3, %v337
  %v339 = vrot.slane %v17, %v338
  %v340 = vlaneseq
  %v341 = vshrl.u32 %v340, 7
  %v342 = vsub.s32 3, %v341
  %v343 = vrot.slane %v19, %v342
  %v344 = vlaneseq
  %v345 = vshrl.u32 %v344, 7
  %v346 = vsub.s32 3, %v345
  %v347 = vrot.slane %v21, %v346
  %v348 = vmul.f32 %v330, %v335
  %v349 = vmul.f32 %v330, %v339
  %v350 = vmul.f32 %v330, %v343
  %v351 = vmul.f32 %v330, %v347
  %v352 = vadd.f32 %v324, %v348
  %v353 = vadd.f32 %v325, %v349
  %v354 = vadd.f32 %v326, %v350
  %v355 = vadd.f32 %v327, %v351
  %v356 = vld [vmem:[%s2] sm:$0x7]
  %358 = vset.pattern.permute.xlu0 0
  %359 = vperm.xlu0 %358, %v356
  %v360 = vpop.permute.xlu0 %359
  %v362 = vadd.f32 %v352, %v360
  %v363 = vadd.f32 %v353, %v360
  %v364 = vadd.f32 %v354, %v360
  %v365 = vadd.f32 %v355, %v360
  %vm366 = vcmask 813056
  %367 = vst.msk [vmem:[%s3] sm:$0x7] %vm366, %v362
  %368 = vst.msk [vmem:[%s3 + $0x4] sm:$0x7] %vm366, %v363
  %369 = vst.msk [vmem:[%s3 + $0x8] sm:$0x7] %vm366, %v364
  %370 = vst.msk [vmem:[%s3 + $0xc] sm:$0x7] %vm366, %v365
  // Predicated region
  $region14: #{tpu_custom_call.1} parent=0 // pred_check
    _
  $region15: #{tpu_custom_call.1} parent=0 // pred_check_branch
    %372 = sbr.rel (0) target = $region17
  $region16: #{tpu_custom_call.1} parent=0 // pred_region
    _
  $region17: #{tpu_custom_call.1} parent=0 // pred_fallthru
    _
  // Predicated region
  $region18: #{tpu_custom_call.1} parent=0 // pred_check
    _
  $region19: #{tpu_custom_call.1} parent=0 // pred_check_branch
    %374 = sbr.rel (0) target = $region21
  $region20: #{tpu_custom_call.1} parent=0 // pred_region
    _
  $region21: #{tpu_custom_call.1} parent=0 // pred_fallthru
    _

</llo_original>
